<compile_context>
chip_gen: v6e
topology: v6e:2x2x1
jax: 0.10.0
libtpu: 0.0.40
codegen_flags: <defaults>
</compile_context>

<pallas_src>
import functools
import numpy as np
import jax
import jax.numpy as jnp
from jax import lax
from jax.experimental import pallas as pl
from jax.experimental.pallas import tpu as pltpu

IN_C = 3
OUT_C = 1

# Deterministic weights, exactly as the PyTorch module builds them in __init__.
# (Used only by the pure-JAX reference; the kernel exploits their structure.)
_k = np.array([[-1, -1, -1], [-1, 8, -1], [-1, -1, -1]], dtype=np.float32) / 3.0
_k = _k.reshape((1, 1, 3, 3))
_k = np.repeat(_k, IN_C, axis=1)
SOBEL_W = np.repeat(_k, OUT_C, axis=0)   # (OUT_C, IN_C, 3, 3)


# ----------------------------------------------------------------------------- kernels
def _sobel_kernel_flat(x_ref, m_ref, o_ref, *, w):
    """Flattened-pixel path. x_ref: (B, C, P), m_ref: (2, P), o_ref: (B, OUT_C, P)."""
    b, c_in, p = x_ref.shape

    # Weights are identical per channel -> sum channels first (3 sliced adds).
    xsum = x_ref[:, 0, :].astype(jnp.float32)
    for c in range(1, c_in):
        xsum = xsum + x_ref[:, c, :].astype(jnp.float32)          # (B, P)

    # Vertical neighbors: roll by +/- W along the flat pixel axis.
    # roll(x, s)[i] == x[i - s]; wrapped positions are exactly the masked rows.
    idx = lax.broadcasted_iota(jnp.int32, (b, p), 1)
    up = jnp.where(idx >= w, pltpu.roll(xsum, shift=w, axis=1), 0.0)
    down = jnp.where(idx < p - w, pltpu.roll(xsum, shift=p - w, axis=1), 0.0)
    vert = up + xsum + down

    # Horizontal neighbors: roll by +/- 1; border-column masks precomputed in wrapper.
    not_col0 = m_ref[0:1, :]          # 1.0 where col != 0
    not_colw = m_ref[1:2, :]          # 1.0 where col != W-1
    left = pltpu.roll(vert, shift=1, axis=1) * not_col0
    right = pltpu.roll(vert, shift=p - 1, axis=1) * not_colw
    box = left + vert + right

    out = (3.0 * xsum - (1.0 / 3.0) * box).astype(o_ref.dtype)
    for o in range(o_ref.shape[1]):                               # OUT_C (=1)
        o_ref[:, o, :] = out


def _sobel_kernel_2d(x_ref, o_ref):
    """Lane-dense 2-D path (W % 128 == 0). x_ref: (B, C, H, W), o_ref: (B, OUT_C, H, W)."""
    b, c_in, h, w = x_ref.shape

    xsum = x_ref[:, 0].astype(jnp.float32)
    for c in range(1, c_in):
        xsum = xsum + x_ref[:, c].astype(jnp.float32)             # (B, H, W)

    row = lax.broadcasted_iota(jnp.int32, (b, h, w), 1)
    col = lax.broadcasted_iota(jnp.int32, (b, h, w), 2)

    up = jnp.where(row > 0, pltpu.roll(xsum, shift=1, axis=1), 0.0)
    down = jnp.where(row < h - 1, pltpu.roll(xsum, shift=h - 1, axis=1), 0.0)
    vert = up + xsum + down
    left = jnp.where(col > 0, pltpu.roll(vert, shift=1, axis=2), 0.0)
    right = jnp.where(col < w - 1, pltpu.roll(vert, shift=w - 1, axis=2), 0.0)
    box = left + vert + right

    out = (3.0 * xsum - (1.0 / 3.0) * box).astype(o_ref.dtype)
    for o in range(o_ref.shape[1]):
        o_ref[:, o] = out


# ----------------------------------------------------------------------------- sizing
def _ceil_to(x, m):
    return ((x + m - 1) // m) * m


def _vmem_limit_bytes():
    try:
        cap = int(pltpu.get_tpu_info().vmem_capacity_bytes)
    except Exception:
        cap = 64 << 20          # conservative: v7x per-TensorCore VMEM
    return max(16 << 20, min(cap - (8 << 20), 120 << 20))


def _two_tensorcores():
    try:
        return "v7" in jax.devices()[0].device_kind.lower()
    except Exception:
        return False


def _choose_b_tile(n, per_image_bytes, vmem_budget, two_cores):
    # Largest divisor of n whose single-buffered block fits the budget.
    max_bt = max(1, vmem_budget // max(per_image_bytes, 1))
    if two_cores and n >= 2:
        # Keep >= 2 grid steps only on 2-TC parts so "parallel" can feed both cores.
        max_bt = min(max_bt, max(1, n // 2))
    bt = 1
    for d in range(1, n + 1):
        if n % d == 0 and d <= max_bt:
            bt = d
    return bt


# ----------------------------------------------------------------------------- wrapper
def sobel_forward(im):
    """im: (N, IN_C, H, W) float -> (N, OUT_C, H, W), same semantics as PyTorch Sobel."""
    n, c, h, w = im.shape
    assert c == IN_C
    p = h * w
    itemsize = jnp.dtype(im.dtype).itemsize

    vmem_limit = _vmem_limit_bytes()
    # Double-buffered (in + out) blocks must stay comfortably under the limit.
    block_budget = int(0.35 * vmem_limit)
    two_cores = _two_tensorcores()

    if w % 128 == 0:
        # Already lane-dense in 2-D layout (also avoids sublane padding on the C axis).
        per_image = (c + OUT_C) * _ceil_to(h, 8) * w * itemsize
        b_tile = _choose_b_tile(n, per_image, block_budget, two_cores)
        return pl.pallas_call(
            _sobel_kernel_2d,
            out_shape=jax.ShapeDtypeStruct((n, OUT_C, h, w), im.dtype),
            grid_spec=pltpu.PrefetchScalarGridSpec(
                num_scalar_prefetch=0,
                grid=(n // b_tile,),
                in_specs=[pl.BlockSpec((b_tile, c, h, w), lambda i: (i, 0, 0, 0))],
                out_specs=pl.BlockSpec((b_tile, OUT_C, h, w), lambda i: (i, 0, 0, 0)),
            ),
            compiler_params=pltpu.CompilerParams(
                dimension_semantics=("parallel",),
                vmem_limit_bytes=vmem_limit,
            ),
        )(im)

    # Narrow / unaligned W: flatten pixels so loads, VPU ops and stores are lane-dense.
    x_flat = im.reshape(n, c, p)

    # Column-border masks (static, computed once in the wrapper; fetched once by Pallas
    # since its block index never changes across the grid).
    col = np.arange(p, dtype=np.int64) % w
    border = np.stack([(col != 0), (col != w - 1)], axis=0).astype(np.float32)   # (2, P)
    border = jnp.asarray(border)

    per_image = (_ceil_to(c, 8) + _ceil_to(OUT_C, 8)) * _ceil_to(p, 128) * itemsize
    b_tile = _choose_b_tile(n, per_image, block_budget, two_cores)

    out_flat = pl.pallas_call(
        functools.partial(_sobel_kernel_flat, w=w),
        out_shape=jax.ShapeDtypeStruct((n, OUT_C, p), im.dtype),
        grid_spec=pltpu.PrefetchScalarGridSpec(
            num_scalar_prefetch=0,
            grid=(n // b_tile,),
            in_specs=[pl.BlockSpec((b_tile, c, p), lambda i: (i, 0, 0)),
                      pl.BlockSpec((2, p), lambda i: (0, 0))],
            out_specs=pl.BlockSpec((b_tile, OUT_C, p), lambda i: (i, 0, 0)),
        ),
        compiler_params=pltpu.CompilerParams(
            dimension_semantics=("parallel",),
            vmem_limit_bytes=vmem_limit,
        ),
    )(x_flat, border)
    return out_flat.reshape(n, OUT_C, h, w)


# ----------------------------------------------------------------------------- reference
def _reference(im):
    # Pure-JAX reference (conv_general_dilated), NCHW / OIHW — mirrors PyTorch.
    return lax.conv_general_dilated(
        im, jnp.asarray(SOBEL_W),
        window_strides=(1, 1), padding=((1, 1), (1, 1)),
        dimension_numbers=("NCHW", "OIHW", "NCHW"),
        precision=lax.Precision.HIGHEST,
    )


if __name__ == "__main__":
    key = jax.random.PRNGKey(0)
    x = jax.random.normal(key, (2, IN_C, 16, 16), dtype=jnp.float32)

    out = jax.block_until_ready(sobel_forward(x))

    ref = _reference(x)
    np.testing.assert_allclose(np.asarray(out), np.asarray(ref), rtol=1e-5, atol=1e-4)
    assert out.shape == (2, OUT_C, 16, 16)
    print("KERNEL_OK")
</pallas_src>

<mosaic_0001>
module attributes {stable_mosaic.version = 11 : i64} {
  func.func @_sobel_kernel_flat(%arg0: i32, %arg1: memref<2x3x256xf32, #tpu.memory_space<vmem>>, %arg2: memref<2x256xf32, #tpu.memory_space<vmem>>, %arg3: memref<2x1x256xf32, #tpu.memory_space<vmem>>) attributes {dimension_semantics = [#tpu.dimension_semantics<parallel>], iteration_bounds = array<i64: 1>, scalar_prefetch = 0 : i64, scratch_operands = 0 : i64, tpu.core_type = #tpu.core_type<tc>, window_params = [{transform_indices = @transform_0, window_bounds = array<i64: 2, 3, 256>}, {pipeline_mode = #tpu.pipeline_mode<synchronous>, transform_indices = @transform_1, window_bounds = array<i64: 2, 256>}, {transform_indices = @transform_2, window_bounds = array<i64: 2, 1, 256>}]} {
    %c0 = arith.constant 0 : index
    %c0_0 = arith.constant 0 : index
    %c0_1 = arith.constant 0 : index
    %0 = vector.load %arg1[%c0, %c0_0, %c0_1] : memref<2x3x256xf32, #tpu.memory_space<vmem>>, vector<2x1x256xf32>
    %1 = vector.shape_cast %0 : vector<2x1x256xf32> to vector<2x256xf32>
    %c0_2 = arith.constant 0 : index
    %c1 = arith.constant 1 : index
    %c0_3 = arith.constant 0 : index
    %2 = vector.load %arg1[%c0_2, %c1, %c0_3] : memref<2x3x256xf32, #tpu.memory_space<vmem>>, vector<2x1x256xf32>
    %3 = vector.shape_cast %2 : vector<2x1x256xf32> to vector<2x256xf32>
    %4 = arith.addf %1, %3 : vector<2x256xf32>
    %c0_4 = arith.constant 0 : index
    %c2 = arith.constant 2 : index
    %c0_5 = arith.constant 0 : index
    %5 = vector.load %arg1[%c0_4, %c2, %c0_5] : memref<2x3x256xf32, #tpu.memory_space<vmem>>, vector<2x1x256xf32>
    %6 = vector.shape_cast %5 : vector<2x1x256xf32> to vector<2x256xf32>
    %7 = arith.addf %4, %6 : vector<2x256xf32>
    %8 = tpu.iota {dimensions = array<i32: 1>} : vector<2x256xi32>
    %c16_i32 = arith.constant 16 : i32
    %9 = vector.broadcast %c16_i32 : i32 to vector<2x256xi32>
    %10 = arith.cmpi sge, %8, %9 : vector<2x256xi32>
    %c16_i32_6 = arith.constant 16 : i32
    %11 = tpu.dynamic_rotate %7 by %c16_i32_6 dim 1 : vector<2x256xf32>, i32 -> vector<2x256xf32>
    %cst = arith.constant 0.000000e+00 : f32
    %12 = vector.broadcast %cst : f32 to vector<2x256xf32>
    %13 = arith.select %10, %11, %12 : vector<2x256xi1>, vector<2x256xf32>
    %c240_i32 = arith.constant 240 : i32
    %14 = vector.broadcast %c240_i32 : i32 to vector<2x256xi32>
    %15 = arith.cmpi slt, %8, %14 : vector<2x256xi32>
    %c240_i32_7 = arith.constant 240 : i32
    %16 = tpu.dynamic_rotate %7 by %c240_i32_7 dim 1 : vector<2x256xf32>, i32 -> vector<2x256xf32>
    %cst_8 = arith.constant 0.000000e+00 : f32
    %17 = vector.broadcast %cst_8 : f32 to vector<2x256xf32>
    %18 = arith.select %15, %16, %17 : vector<2x256xi1>, vector<2x256xf32>
    %19 = arith.addf %13, %7 : vector<2x256xf32>
    %20 = arith.addf %19, %18 : vector<2x256xf32>
    %c0_9 = arith.constant 0 : index
    %c0_10 = arith.constant 0 : index
    %21 = vector.load %arg2[%c0_9, %c0_10] : memref<2x256xf32, #tpu.memory_space<vmem>>, vector<1x256xf32>
    %c1_11 = arith.constant 1 : index
    %c0_12 = arith.constant 0 : index
    %22 = vector.load %arg2[%c1_11, %c0_12] : memref<2x256xf32, #tpu.memory_space<vmem>>, vector<1x256xf32>
    %c1_i32 = arith.constant 1 : i32
    %23 = tpu.dynamic_rotate %20 by %c1_i32 dim 1 : vector<2x256xf32>, i32 -> vector<2x256xf32>
    %24 = vector.broadcast %21 : vector<1x256xf32> to vector<2x256xf32>
    %25 = arith.mulf %23, %24 : vector<2x256xf32>
    %c255_i32 = arith.constant 255 : i32
    %26 = tpu.dynamic_rotate %20 by %c255_i32 dim 1 : vector<2x256xf32>, i32 -> vector<2x256xf32>
    %27 = vector.broadcast %22 : vector<1x256xf32> to vector<2x256xf32>
    %28 = arith.mulf %26, %27 : vector<2x256xf32>
    %29 = arith.addf %25, %20 : vector<2x256xf32>
    %30 = arith.addf %29, %28 : vector<2x256xf32>
    %cst_13 = arith.constant 3.000000e+00 : f32
    %31 = vector.broadcast %cst_13 : f32 to vector<2x256xf32>
    %32 = arith.mulf %31, %7 : vector<2x256xf32>
    %cst_14 = arith.constant 0.333333343 : f32
    %33 = vector.broadcast %cst_14 : f32 to vector<2x256xf32>
    %34 = arith.mulf %33, %30 : vector<2x256xf32>
    %35 = arith.subf %32, %34 : vector<2x256xf32>
    %c0_15 = arith.constant 0 : index
    %c0_16 = arith.constant 0 : index
    %c0_17 = arith.constant 0 : index
    %36 = vector.load %arg3[%c0_15, %c0_16, %c0_17] : memref<2x1x256xf32, #tpu.memory_space<vmem>>, vector<2x1x256xf32>
    %37 = vector.shape_cast %36 : vector<2x1x256xf32> to vector<2x256xf32>
    %38 = vector.shape_cast %35 : vector<2x256xf32> to vector<2x1x256xf32>
    tpu.vector_store %arg3[%c0_15, %c0_16, %c0_17], %38 {strides = array<i32>} : memref<2x1x256xf32, #tpu.memory_space<vmem>>, vector<2x1x256xf32>,
    return
  }
  func.func @transform_0(%arg0: i32) -> (i32, i32, i32) {
    %c0_i32 = arith.constant 0 : i32
    %c0_i32_0 = arith.constant 0 : i32
    %c0_i32_1 = arith.constant 0 : i32
    return %arg0, %c0_i32, %c0_i32_0 : i32, i32, i32
  }
  func.func @transform_1(%arg0: i32) -> (i32, i32) {
    %c0_i32 = arith.constant 0 : i32
    %c0_i32_0 = arith.constant 0 : i32
    %c0_i32_1 = arith.constant 0 : i32
    return %c0_i32, %c0_i32_0 : i32, i32
  }
  func.func @transform_2(%arg0: i32) -> (i32, i32, i32) {
    %c0_i32 = arith.constant 0 : i32
    %c0_i32_0 = arith.constant 0 : i32
    %c0_i32_1 = arith.constant 0 : i32
    return %arg0, %c0_i32, %c0_i32_0 : i32, i32, i32
  }
}

</mosaic_0001>

<llo_original>
// kernel: tpu_custom_call.1
$region0: #{tpu_custom_call.1}
  #allocation0 [shape = 'u32[]', space=smem, size = 0x4, offset = 0x4, fixed_abs, tag = 'smem constant byte address 0x4 - core index']
  #allocation1 [shape = 'u32[144,128]{1,0:T(1,128)}', space=vmem, size = 0x12000, scoped, tag = 'internal scratch']
  %s0 = inlined_call_operand.vmem [shape: f32[2,3,256], index: 0, kind: input, shape index: {}]
  %s1 = inlined_call_operand.vmem [shape: f32[2,256], index: 1, kind: input, shape index: {}]
  %s2 = inlined_call_operand.hbm [shape: f32[2,1,256], index: 2, kind: output, shape index: {}]
  %s3 = sld [smem:[#allocation0]]
  $region18: #{tpu_custom_call.1} parent=0
    _
  %s5 = ssub.s32 1, %s3
  %s6 = scalar_select 0, %s5, %s3
  $region1: #{tpu_custom_call.1} parent=0
    #allocation2 [shape = 'u8[2048]{0}', space=vmem, size = 0x800, scoped, tag = 'output window, operand 0, single buffered']
    #allocation3 [shape = 's32[1]{0}', space=sflag, size = 0x4, scoped, tag = 'scoped memory for tpu_custom_call.1']
    %7 = vsyncpa [#allocation3], 0
    // Predicated region
    $region2: #{tpu_custom_call.1} parent=1 // pred_check
      _
    $region3: #{tpu_custom_call.1} parent=1 // pred_check_branch
      %9 = sbr.rel (0) target = $region5
    $region4: #{tpu_custom_call.1} parent=1 // pred_region
      _
    $region5: #{tpu_custom_call.1} parent=1 // pred_fallthru
      _
    // Predicated region
    $region6: #{tpu_custom_call.1} parent=1 // pred_check
      _
    $region7: #{tpu_custom_call.1} parent=1 // pred_check_branch
      %11 = sbr.rel (0) target = $region9
    $region8: #{tpu_custom_call.1} parent=1 // pred_region
      _
    $region9: #{tpu_custom_call.1} parent=1 // pred_fallthru
      _
    %v12 = vld [vmem:[%s0] ss:$4 sm:$0x3]
    %s13 = scalar_lea.vmem %s0, 8
    %v14 = vld [vmem:[%s13] ss:$4 sm:$0x3]
    %s15 = scalar_lea.vmem %s0, 1
    %v16 = vld [vmem:[%s15] ss:$4 sm:$0x3]
    %s17 = scalar_lea.vmem %s0, 9
    %v18 = vld [vmem:[%s17] ss:$4 sm:$0x3]
    %v19 = vadd.f32 %v12, %v16
    %v20 = vadd.f32 %v14, %v18
    %s21 = scalar_lea.vmem %s0, 2
    %v22 = vld [vmem:[%s21] ss:$4 sm:$0x3]
    %s23 = scalar_lea.vmem %s0, 10
    %v24 = vld [vmem:[%s23] ss:$4 sm:$0x3]
    %v25 = vadd.f32 %v19, %v22
    %v26 = vadd.f32 %v20, %v24
    %v27 = vlaneseq
    %v28 = vand.u32 %v27, 127
    %v29 = vadd.s32 %v28, 128
    %vm30 = vcmp.ge.s32.totalorder %v28, 16
    %vm31 = vcmp.ge.s32.totalorder %v29, 16
    %v34 = vcombine.low %v25, %v26
    %v36 = vunpack.c.l.s4 1966171168
    %v37 = vunpack.c.0.s8 %v36
    %v38 = vlaneseq
    %v39 = vshrl.u32 %v38, 7
    %v40 = vsub.s32 %v37, %v39
    %v41 = vrot.slane %v34, %v40
    %v42 = vcombine.high %v41, %v41
    %v44 = vunpack.c.l.s4 1966171168
    %v45 = vunpack.c.0.s8 %v44
    %v46 = vlaneseq
    %v47 = vshrl.u32 %v46, 7
    %v48 = vsub.s32 %v45, %v47
    %v49 = vrot.slane %v41, %v48
    %v51 = vunpack.c.l.s4 1966171168
    %v52 = vunpack.c.0.s8 %v51
    %v53 = vlaneseq
    %v54 = vshrl.u32 %v53, 7
    %v55 = vsub.s32 %v52, %v54
    %v56 = vrot.slane %v42, %v55
    %59 = vrot.lane.b32.xlu0 %v49, 16
    %v60 = vpop.permute.xlu0 %59
    %61 = vrot.lane.b32.xlu0 %v56, 16
    %v62 = vpop.permute.xlu0 %61
    %vm63 = vcmp.lt.s32.totalorder %v28, 16
    %v64 = vsel %vm63, %v60, %v62
    %v65 = vsel %vm63, %v62, %v60
    %v66 = vsel %vm30, %v65, 0.0
    %v67 = vsel %vm31, %v64, 0.0
    %vm68 = vcmp.lt.s32.totalorder %v28, 240
    %vm69 = vcmp.lt.s32.totalorder %v29, 240
    %70 = vrot.lane.b32.xlu0 %v49, 112
    %v71 = vpop.permute.xlu0 %70
    %72 = vrot.lane.b32.xlu0 %v56, 112
    %v73 = vpop.permute.xlu0 %72
    %vm74 = vcmp.lt.s32.totalorder %v28, 112
    %v75 = vsel %vm74, %v71, %v73
    %v76 = vsel %vm74, %v73, %v71
    %v77 = vsel %vm68, %v75, 0.0
    %v78 = vsel %vm69, %v76, 0.0
    %v79 = vadd.f32 %v66, %v49
    %v80 = vadd.f32 %v67, %v56
    %v81 = vadd.f32 %v79, %v77
    %v82 = vadd.f32 %v80, %v78
    %v83 = vld [vmem:[%s1] ss:$2 sm:$0x3]
    %s84 = scalar_lea.vmem %s1, 1
    %v85 = vld [vmem:[%s84] ss:$2 sm:$0x3]
    %86 = vrot.lane.b32.xlu0 %v81, 1
    %v87 = vpop.permute.xlu0 %86
    %88 = vrot.lane.b32.xlu0 %v82, 1
    %v89 = vpop.permute.xlu0 %88
    %vm90 = vcmp.lt.s32.totalorder %v28, 1
    %v91 = vsel %vm90, %v87, %v89
    %v92 = vsel %vm90, %v89, %v87
    %v94 = vlaneseq
    %v95 = vshrl.u32 %v94, 7
    %v96 = vsub.s32 0, %v95
    %v97 = vrot.slane %v83, %v96
    %v98 = vlaneseq
    %v99 = vshrl.u32 %v98, 7
    %v100 = vsub.s32 1, %v99
    %v101 = vrot.slane %v83, %v100
    %v104 = vmul.f32 %v92, %v97
    %v105 = vmul.f32 %v91, %v101
    %106 = vrot.lane.b32.xlu0 %v81, 127
    %v107 = vpop.permute.xlu0 %106
    %108 = vrot.lane.b32.xlu0 %v82, 127
    %v109 = vpop.permute.xlu0 %108
    %vm110 = vcmp.lt.s32.totalorder %v28, 127
    %v111 = vsel %vm110, %v107, %v109
    %v112 = vsel %vm110, %v109, %v107
    %v114 = vlaneseq
    %v115 = vshrl.u32 %v114, 7
    %v116 = vsub.s32 0, %v115
    %v117 = vrot.slane %v85, %v116
    %v118 = vlaneseq
    %v119 = vshrl.u32 %v118, 7
    %v120 = vsub.s32 1, %v119
    %v121 = vrot.slane %v85, %v120
    %v124 = vmul.f32 %v111, %v117
    %v125 = vmul.f32 %v112, %v121
    %v126 = vadd.f32 %v104, %v81
    %v127 = vadd.f32 %v105, %v82
    %v128 = vadd.f32 %v126, %v124
    %v129 = vadd.f32 %v127, %v125
    %v130 = vmul.f32 %v25, 3.0
    %v131 = vmul.f32 %v26, 3.0
    %v132 = vmul.f32 %v128, 0.33333334
    %v133 = vmul.f32 %v129, 0.33333334
    %v136 = vcombine.low %v132, %v133
    %v138 = vunpack.c.l.s4 1966171168
    %v139 = vunpack.c.0.s8 %v138
    %v140 = vlaneseq
    %v141 = vshrl.u32 %v140, 7
    %v142 = vsub.s32 %v139, %v141
    %v143 = vrot.slane %v136, %v142
    %v144 = vcombine.high %v143, %v143
    %v146 = vunpack.c.l.s4 1966171168
    %v147 = vunpack.c.0.s8 %v146
    %v148 = vlaneseq
    %v149 = vshrl.u32 %v148, 7
    %v150 = vsub.s32 %v147, %v149
    %v151 = vrot.slane %v143, %v150
    %v153 = vunpack.c.l.s4 1966171168
    %v154 = vunpack.c.0.s8 %v153
    %v155 = vlaneseq
    %v156 = vshrl.u32 %v155, 7
    %v157 = vsub.s32 %v154, %v156
    %v158 = vrot.slane %v144, %v157
    %v161 = vsub.f32 %v130, %v151
    %v162 = vsub.f32 %v131, %v158
    %v163 = vlaneseq
    %vm164 = vcmp.ge.s32.totalorder %v163, 0
    %vm165 = vcmp.lt.s32.totalorder %v163, 256
    %vm166 = vmand %vm164, %vm165
    %167 = vst.msk [vmem:[#allocation2] sm:$0x3] %vm166, %v161
    %168 = vst.msk [vmem:[#allocation2 + $0x2] sm:$0x3] %vm166, %v162
    // Predicated region
    $region10: #{tpu_custom_call.1} parent=1 // pred_check
      _
    $region11: #{tpu_custom_call.1} parent=1 // pred_check_branch
      %170 = sbr.rel (0) target = $region13
    $region12: #{tpu_custom_call.1} parent=1 // pred_region
      %s172 = ssub.s32 64, 64
      %173 = vsyncadd [#allocation3], %s172
      %s174 = sshll.u32 [#allocation2], 4
      %s175 = int_to_ptr.vmem [resolvable:$true] %s174
      %180 = dma.vmem_to_hbm [thread:$0]  %s175, 64, %s2, [#allocation3], 32, 32, 2
    $region13: #{tpu_custom_call.1} parent=1 // pred_fallthru
      _
    // Predicated region
    $region14: #{tpu_custom_call.1} parent=1 // pred_check
      _
    $region15: #{tpu_custom_call.1} parent=1 // pred_check_branch
      %182 = sbr.rel (0) target = $region17
    $region16: #{tpu_custom_call.1} parent=1 // pred_region
      %183 = dma.done [#allocation3], 64
    $region17: #{tpu_custom_call.1} parent=1 // pred_fallthru
      _
    %184 = vsyncpa [#allocation3], 1

</llo_original>
